<compile_context>
chip_gen: v5e
topology: v5e:2x2
jax: 0.10.0
libtpu: 0.0.40
codegen_flags: <defaults>
</compile_context>

<pallas_src>
import jax
import jax.numpy as jnp
import numpy as np
from jax import lax
from jax.experimental import pallas as pl
from jax.experimental.pallas import tpu as pltpu

EPS = 1e-8


def _round_up(x, m):
    return ((x + m - 1) // m) * m


# --------------------------- streaming count kernel ---------------------------
def _make_count_kernel(n_true, blk_n, tiles_per_split, need_mask):
    """Accumulates per-split partial counts: d = Yhat^T Y, column counts of Yhat/Y."""

    def kernel(yhat_ref, y_ref, d_ref, cx_ref, cy_ref):
        i = pl.program_id(1)

        @pl.when(i == 0)
        def _init():
            d_ref[...] = jnp.zeros_like(d_ref)
            cx_ref[...] = jnp.zeros_like(cx_ref)
            cy_ref[...] = jnp.zeros_like(cy_ref)

        xb = yhat_ref[...]              # (blk_n, k1), native input dtype
        yb = y_ref[...]                 # (blk_n, k2)

        if need_mask:
            # Ragged tail / over-provisioned split tiles: zero out rows >= n.
            s = pl.program_id(0)
            g_start = (s * tiles_per_split + i) * blk_n
            row = lax.broadcasted_iota(jnp.int32, (blk_n, 1), 0)
            valid = (g_start + row) < n_true
            xb = jnp.where(valid, xb, jnp.zeros_like(xb))
            yb = jnp.where(valid, yb, jnp.zeros_like(yb))

        # Binary memberships -> bf16 MXU operands are exact; accumulate in f32.
        xb_mm = xb.astype(jnp.bfloat16)
        yb_mm = yb.astype(jnp.bfloat16)
        # Contract the sample axis of both operands (transposed-LHS matmul; the MXU
        # consumes this directly, no explicit XLU transpose observed previously).
        dims = (((0,), (0,)), ((), ()))

        d_ref[0] += lax.dot_general(xb_mm, yb_mm, dims,
                                    preferred_element_type=jnp.float32)
        # Per-cluster counts via plain reductions (no ones-matmuls, no per-iter
        # ones materialization): cheap VPU/XLU work hidden under the HBM stream.
        cx_ref[0] += jnp.sum(xb.astype(jnp.float32), axis=0, keepdims=True)  # (1, k1)
        cy_ref[0] += jnp.sum(yb.astype(jnp.float32), axis=0, keepdims=True)  # (1, k2)

    return kernel


# ------------------------------ finalize kernel -------------------------------
def _make_finalize_kernel(n_true, k1, k2):
    n_f = float(n_true)

    def h(w):
        # h(w, n) = -w * log2((w + 1e-8) / n)
        return -w * jnp.log2((w + EPS) / n_f)

    def kernel(d_ref, cx_ref, cy_ref, out_ref):
        d = jnp.sum(d_ref[...], axis=0)            # (k1, k2)  TP counts
        cx_row = jnp.sum(cx_ref[...], axis=0)      # (1,  k1)  |Yhat cluster i|
        cy_row = jnp.sum(cy_ref[...], axis=0)      # (1,  k2)  |Y cluster j|

        # Lane-vector (1,k1) -> column (k1,1) via iota/select/lane-reduce
        # (avoids relying on a tiny odd-shaped transpose lowering).
        r = lax.broadcasted_iota(jnp.int32, (k1, k1), 0)
        c = lax.broadcasted_iota(jnp.int32, (k1, k1), 1)
        cx_col = jnp.sum(jnp.where(r == c, cx_row, 0.0), axis=1, keepdims=True)

        # Unconditional entropies.
        HYhat = jnp.sum(h(cx_col) + h(n_f - cx_col))
        HY = jnp.sum(h(cy_row) + h(n_f - cy_row))

        # Remaining confusion entries derived algebraically from the counts.
        c_fp = cx_col - d                       # FP = Yhat^T (1 - Y)
        b_fn = cy_row - d                       # FN = (1 - Yhat)^T Y
        a_tn = n_f - cx_col - cy_row + d        # TN = (1 - Yhat)^T (1 - Y)

        ha, hb, hc, hd = h(a_tn), h(b_fn), h(c_fp), h(d)
        hab = h(n_f - cx_col)                   # h(a + b)
        hcd = h(cx_col)                         # h(c + d)
        hbd = h(cy_row)                         # h(b + d)
        hac = h(n_f - cy_row)                   # h(a + c)

        ssum = ha + hb + hc + hd
        keep = (ha + hd) >= (hb + hc)

        # CondEntropy(Y_hat, Y): rows = Yhat clusters, min over Y clusters (axis 1).
        cond1 = jnp.where(keep, ssum - hbd - hac, hab + hcd)
        HYhatY = jnp.sum(jnp.min(cond1, axis=1))
        # CondEntropy(Y, Y_hat) is the transposed problem: reuse the same entropy
        # terms, min over axis 0 instead.
        cond2 = jnp.where(keep, ssum - hcd - hab, hac + hbd)
        HYYhat = jnp.sum(jnp.min(cond2, axis=0))

        nmi = 0.5 * (HY + HYhat - HYYhat - HYhatY) / jnp.maximum(HY, HYhat)
        out_ref[0, 0] = nmi

    return kernel


# ---------------------------------- wrapper ------------------------------------
def overlapping_nmi(Y_hat, Y, *, tile_n=16384, num_splits=2):
    """Overlapping NMI of two binary membership matrices (n, k1) / (n, k2)."""
    Y_hat = jnp.asarray(Y_hat)
    Y = jnp.asarray(Y)
    assert Y_hat.ndim == 2 and Y.ndim == 2
    n, k1 = Y_hat.shape
    n2, k2 = Y.shape
    assert n == n2, "Y_hat and Y must have the same number of samples"

    # --- tile-size selection, VMEM-budgeted ---
    # One (blk, k) input block costs blk * round_up(k, 128) * itemsize bytes in VMEM
    # (lane axis pads to 128); 2 inputs x 2 pipeline buffers.
    itemsize = int(max(Y_hat.dtype.itemsize, Y.dtype.itemsize))
    lane1 = _round_up(max(k1, 1), 128)
    lane2 = _round_up(max(k2, 1), 128)
    bytes_per_row = 2 * (lane1 + lane2) * itemsize
    vmem_budget = 40 * 1024 * 1024          # stays well under v7x's 64 MiB VMEM
    blk_n = min(int(tile_n), max(vmem_budget // bytes_per_row, 256), _round_up(n, 32))
    blk_n = max((blk_n // 32) * 32, 32)     # works for f32 / bf16 / int8 sublane packing

    total_tiles = pl.cdiv(n, blk_n)
    num_splits = max(1, min(int(num_splits), total_tiles))   # 2-way split feeds both v7x TCs
    tiles_per_split = pl.cdiv(total_tiles, num_splits)
    need_mask = (n % blk_n != 0) or (num_splits * tiles_per_split != total_tiles)

    def in_map(s, i):
        # Clamp so over-provisioned split tiles re-read the last tile (their rows
        # are fully masked inside the kernel and contribute nothing).
        t = jnp.minimum(s * tiles_per_split + i, total_tiles - 1)
        return (t, 0)

    count_kernel = _make_count_kernel(n, blk_n, tiles_per_split, need_mask)
    vmem_limit = int(min(bytes_per_row * blk_n + (8 << 20), 48 << 20))

    d_part, cx_part, cy_part = pl.pallas_call(
        count_kernel,
        out_shape=(
            jax.ShapeDtypeStruct((num_splits, k1, k2), jnp.float32),
            jax.ShapeDtypeStruct((num_splits, 1, k1), jnp.float32),
            jax.ShapeDtypeStruct((num_splits, 1, k2), jnp.float32),
        ),
        grid_spec=pltpu.PrefetchScalarGridSpec(
            num_scalar_prefetch=0,
            grid=(num_splits, tiles_per_split),
            in_specs=[
                pl.BlockSpec((blk_n, k1), in_map),
                pl.BlockSpec((blk_n, k2), in_map),
            ],
            out_specs=[
                pl.BlockSpec((1, k1, k2), lambda s, i: (s, 0, 0)),
                pl.BlockSpec((1, 1, k1), lambda s, i: (s, 0, 0)),
                pl.BlockSpec((1, 1, k2), lambda s, i: (s, 0, 0)),
            ],
        ),
        compiler_params=pltpu.CompilerParams(
            dimension_semantics=("parallel", "arbitrary"),
            vmem_limit_bytes=vmem_limit,
        ),
    )(Y_hat, Y)

    finalize_kernel = _make_finalize_kernel(n, k1, k2)
    out = pl.pallas_call(
        finalize_kernel,
        out_shape=jax.ShapeDtypeStruct((1, 1), jnp.float32),
        grid=(1,),
        in_specs=[
            pl.BlockSpec((num_splits, k1, k2), lambda i: (0, 0, 0)),
            pl.BlockSpec((num_splits, 1, k1), lambda i: (0, 0, 0)),
            pl.BlockSpec((num_splits, 1, k2), lambda i: (0, 0, 0)),
        ],
        out_specs=pl.BlockSpec((1, 1), lambda i: (0, 0)),
    )(d_part, cx_part, cy_part)

    # equivalent of torch .item()
    return out[0, 0]


# ----------------------- pure numpy reference (for checking) -----------------------
def _ref_h(w, n):
    return -w * np.log2((w + EPS) / n)


def _ref_uncond(X):
    n = X.shape[0]
    onenum = X.sum(axis=0)
    zeronum = n - onenum
    return np.sum(_ref_h(onenum, n) + _ref_h(zeronum, n))


def _ref_cond(X, Y):
    n = X.shape[0]
    a = (1.0 - X).T @ (1.0 - Y)
    b = (1.0 - X).T @ Y
    c = X.T @ (1.0 - Y)
    d = X.T @ Y
    ha, hb, hc, hd = _ref_h(a, n), _ref_h(b, n), _ref_h(c, n), _ref_h(d, n)
    hab, hcd = _ref_h(a + b, n), _ref_h(c + d, n)
    hbd, hac = _ref_h(b + d, n), _ref_h(a + c, n)
    cond = ha + hb + hc + hd - hbd - hac
    mask = (ha + hd >= hb + hc).astype(np.float32)
    cond = cond * mask + (hab + hcd) * (1.0 - mask)
    return np.sum(cond.min(axis=1))


def ref_overlapping_nmi(Y_hat, Y):
    HY = _ref_uncond(Y)
    HYhat = _ref_uncond(Y_hat)
    HYYhat = _ref_cond(Y, Y_hat)
    HYhatY = _ref_cond(Y_hat, Y)
    return 0.5 * (HY + HYhat - HYYhat - HYhatY) / max(HY, HYhat)


if __name__ == "__main__":
    key = jax.random.PRNGKey(0)

    # Test 1: small, single tile, single split.
    k_a, k_b = jax.random.split(key)
    n, k1, k2 = 64, 8, 16
    Y_hat = (jax.random.uniform(k_a, (n, k1)) < 0.3).astype(jnp.float32)
    Y = (jax.random.uniform(k_b, (n, k2)) < 0.3).astype(jnp.float32)
    nmi = jax.block_until_ready(overlapping_nmi(Y_hat, Y))
    ref = ref_overlapping_nmi(np.asarray(Y_hat, np.float32), np.asarray(Y, np.float32))
    assert np.isfinite(float(nmi))
    np.testing.assert_allclose(float(nmi), float(ref), rtol=5e-4, atol=1e-4)

    # Test 2: multi-tile grid, 2-way split, ragged tail (exercises mask + clamp path).
    k_c, k_d = jax.random.split(k_a)
    n, k1, k2 = 300, 8, 20
    Y_hat2 = (jax.random.uniform(k_c, (n, k1)) < 0.25).astype(jnp.float32)
    Y2 = (jax.random.uniform(k_d, (n, k2)) < 0.25).astype(jnp.float32)
    nmi2 = jax.block_until_ready(overlapping_nmi(Y_hat2, Y2, tile_n=128))
    ref2 = ref_overlapping_nmi(np.asarray(Y_hat2, np.float32), np.asarray(Y2, np.float32))
    assert np.isfinite(float(nmi2))
    np.testing.assert_allclose(float(nmi2), float(ref2), rtol=5e-4, atol=1e-4)

    print("KERNEL_OK")
</pallas_src>

<mosaic_0001>
module attributes {stable_mosaic.version = 11 : i64} {
  func.func @kernel(%arg0: i32, %arg1: i32, %arg2: memref<64x8xf32, #tpu.memory_space<vmem>>, %arg3: memref<64x16xf32, #tpu.memory_space<vmem>>, %arg4: memref<1x8x16xf32, #tpu.memory_space<vmem>>, %arg5: memref<1x1x8xf32, #tpu.memory_space<vmem>>, %arg6: memref<1x1x16xf32, #tpu.memory_space<vmem>>) attributes {dimension_semantics = [#tpu.dimension_semantics<parallel>, #tpu.dimension_semantics<arbitrary>], iteration_bounds = array<i64: 1, 1>, scalar_prefetch = 0 : i64, scratch_operands = 0 : i64, tpu.core_type = #tpu.core_type<tc>, window_params = [{transform_indices = @transform_0, window_bounds = array<i64: 64, 8>}, {transform_indices = @transform_1, window_bounds = array<i64: 64, 16>}, {transform_indices = @transform_2, window_bounds = array<i64: 1, 8, 16>}, {transform_indices = @transform_3, window_bounds = array<i64: 1, 1, 8>}, {transform_indices = @transform_4, window_bounds = array<i64: 1, 1, 16>}]} {
    %c0_i32 = arith.constant 0 : i32
    %0 = arith.cmpi eq, %arg1, %c0_i32 : i32
    %1 = arith.extui %0 : i1 to i32
    %c0_i32_0 = arith.constant 0 : i32
    %2 = arith.cmpi ne, %1, %c0_i32_0 : i32
    scf.if %2 {
      %cst_24 = arith.constant 0.000000e+00 : f32
      %30 = vector.broadcast %cst_24 : f32 to vector<1x8x16xf32>
      %c0_25 = arith.constant 0 : index
      %c0_26 = arith.constant 0 : index
      %c0_27 = arith.constant 0 : index
      %31 = vector.load %arg4[%c0_25, %c0_26, %c0_27] : memref<1x8x16xf32, #tpu.memory_space<vmem>>, vector<1x8x16xf32>
      tpu.vector_store %arg4[%c0_25, %c0_26, %c0_27], %30 {strides = array<i32>} : memref<1x8x16xf32, #tpu.memory_space<vmem>>, vector<1x8x16xf32>,
      %cst_28 = arith.constant 0.000000e+00 : f32
      %32 = vector.broadcast %cst_28 : f32 to vector<1x1x8xf32>
      %c0_29 = arith.constant 0 : index
      %c0_30 = arith.constant 0 : index
      %c0_31 = arith.constant 0 : index
      %33 = vector.load %arg5[%c0_29, %c0_30, %c0_31] : memref<1x1x8xf32, #tpu.memory_space<vmem>>, vector<1x1x8xf32>
      tpu.vector_store %arg5[%c0_29, %c0_30, %c0_31], %32 {strides = array<i32>} : memref<1x1x8xf32, #tpu.memory_space<vmem>>, vector<1x1x8xf32>,
      %cst_32 = arith.constant 0.000000e+00 : f32
      %34 = vector.broadcast %cst_32 : f32 to vector<1x1x16xf32>
      %c0_33 = arith.constant 0 : index
      %c0_34 = arith.constant 0 : index
      %c0_35 = arith.constant 0 : index
      %35 = vector.load %arg6[%c0_33, %c0_34, %c0_35] : memref<1x1x16xf32, #tpu.memory_space<vmem>>, vector<1x1x16xf32>
      tpu.vector_store %arg6[%c0_33, %c0_34, %c0_35], %34 {strides = array<i32>} : memref<1x1x16xf32, #tpu.memory_space<vmem>>, vector<1x1x16xf32>,
    } else {
    }
    %c0 = arith.constant 0 : index
    %c0_1 = arith.constant 0 : index
    %3 = vector.load %arg2[%c0, %c0_1] : memref<64x8xf32, #tpu.memory_space<vmem>>, vector<64x8xf32>
    %c0_2 = arith.constant 0 : index
    %c0_3 = arith.constant 0 : index
    %4 = vector.load %arg3[%c0_2, %c0_3] : memref<64x16xf32, #tpu.memory_space<vmem>>, vector<64x16xf32>
    %5 = arith.truncf %3 : vector<64x8xf32> to vector<64x8xbf16>
    %6 = arith.truncf %4 : vector<64x16xf32> to vector<64x16xbf16>
    %c0_4 = arith.constant 0 : index
    %c0_5 = arith.constant 0 : index
    %c0_6 = arith.constant 0 : index
    %7 = vector.load %arg4[%c0_4, %c0_5, %c0_6] : memref<1x8x16xf32, #tpu.memory_space<vmem>>, vector<1x8x16xf32>
    %8 = vector.shape_cast %7 : vector<1x8x16xf32> to vector<8x16xf32>
    %cst = arith.constant dense<0.000000e+00> : vector<8x16xf32>
    %9 = tpu.matmul %5, %6, %cst {dimension_numbers = #tpu.dot_dimension_numbers<[0], [0], [1], [1], [0, 1, 1, 1], [], []>} : vector<64x8xbf16>, vector<64x16xbf16>, vector<8x16xf32> -> vector<8x16xf32>
    %10 = arith.addf %8, %9 : vector<8x16xf32>
    %c0_7 = arith.constant 0 : index
    %c0_8 = arith.constant 0 : index
    %c0_9 = arith.constant 0 : index
    %11 = vector.load %arg4[%c0_7, %c0_8, %c0_9] : memref<1x8x16xf32, #tpu.memory_space<vmem>>, vector<1x8x16xf32>
    %12 = vector.shape_cast %11 : vector<1x8x16xf32> to vector<8x16xf32>
    %13 = vector.shape_cast %10 : vector<8x16xf32> to vector<1x8x16xf32>
    tpu.vector_store %arg4[%c0_7, %c0_8, %c0_9], %13 {strides = array<i32>} : memref<1x8x16xf32, #tpu.memory_space<vmem>>, vector<1x8x16xf32>,
    %c0_10 = arith.constant 0 : index
    %c0_11 = arith.constant 0 : index
    %c0_12 = arith.constant 0 : index
    %14 = vector.load %arg5[%c0_10, %c0_11, %c0_12] : memref<1x1x8xf32, #tpu.memory_space<vmem>>, vector<1x1x8xf32>
    %15 = vector.shape_cast %14 : vector<1x1x8xf32> to vector<1x8xf32>
    %cst_13 = arith.constant dense<0.000000e+00> : vector<8xf32>
    %16 = vector.multi_reduction <add>, %3, %cst_13 [0] : vector<64x8xf32> to vector<8xf32>
    %17 = vector.shape_cast %16 : vector<8xf32> to vector<1x8xf32>
    %18 = arith.addf %15, %17 : vector<1x8xf32>
    %c0_14 = arith.constant 0 : index
    %c0_15 = arith.constant 0 : index
    %c0_16 = arith.constant 0 : index
    %19 = vector.load %arg5[%c0_14, %c0_15, %c0_16] : memref<1x1x8xf32, #tpu.memory_space<vmem>>, vector<1x1x8xf32>
    %20 = vector.shape_cast %19 : vector<1x1x8xf32> to vector<1x8xf32>
    %21 = vector.shape_cast %18 : vector<1x8xf32> to vector<1x1x8xf32>
    tpu.vector_store %arg5[%c0_14, %c0_15, %c0_16], %21 {strides = array<i32>} : memref<1x1x8xf32, #tpu.memory_space<vmem>>, vector<1x1x8xf32>,
    %c0_17 = arith.constant 0 : index
    %c0_18 = arith.constant 0 : index
    %c0_19 = arith.constant 0 : index
    %22 = vector.load %arg6[%c0_17, %c0_18, %c0_19] : memref<1x1x16xf32, #tpu.memory_space<vmem>>, vector<1x1x16xf32>
    %23 = vector.shape_cast %22 : vector<1x1x16xf32> to vector<1x16xf32>
    %cst_20 = arith.constant dense<0.000000e+00> : vector<16xf32>
    %24 = vector.multi_reduction <add>, %4, %cst_20 [0] : vector<64x16xf32> to vector<16xf32>
    %25 = vector.shape_cast %24 : vector<16xf32> to vector<1x16xf32>
    %26 = arith.addf %23, %25 : vector<1x16xf32>
    %c0_21 = arith.constant 0 : index
    %c0_22 = arith.constant 0 : index
    %c0_23 = arith.constant 0 : index
    %27 = vector.load %arg6[%c0_21, %c0_22, %c0_23] : memref<1x1x16xf32, #tpu.memory_space<vmem>>, vector<1x1x16xf32>
    %28 = vector.shape_cast %27 : vector<1x1x16xf32> to vector<1x16xf32>
    %29 = vector.shape_cast %26 : vector<1x16xf32> to vector<1x1x16xf32>
    tpu.vector_store %arg6[%c0_21, %c0_22, %c0_23], %29 {strides = array<i32>} : memref<1x1x16xf32, #tpu.memory_space<vmem>>, vector<1x1x16xf32>,
    return
  }
  func.func @transform_0(%arg0: i32, %arg1: i32) -> (i32, i32) {
    %c1_i32 = arith.constant 1 : i32
    %0 = arith.muli %arg0, %c1_i32 : i32
    %1 = arith.addi %0, %arg1 : i32
    %c0_i32 = arith.constant 0 : i32
    %2 = arith.minsi %1, %c0_i32 : i32
    %c0_i32_0 = arith.constant 0 : i32
    %c0_i32_1 = arith.constant 0 : i32
    return %2, %c0_i32_0 : i32, i32
  }
  func.func @transform_1(%arg0: i32, %arg1: i32) -> (i32, i32) {
    %c1_i32 = arith.constant 1 : i32
    %0 = arith.muli %arg0, %c1_i32 : i32
    %1 = arith.addi %0, %arg1 : i32
    %c0_i32 = arith.constant 0 : i32
    %2 = arith.minsi %1, %c0_i32 : i32
    %c0_i32_0 = arith.constant 0 : i32
    %c0_i32_1 = arith.constant 0 : i32
    return %2, %c0_i32_0 : i32, i32
  }
  func.func @transform_2(%arg0: i32, %arg1: i32) -> (i32, i32, i32) {
    %c0_i32 = arith.constant 0 : i32
    %c0_i32_0 = arith.constant 0 : i32
    %c0_i32_1 = arith.constant 0 : i32
    return %arg0, %c0_i32, %c0_i32_0 : i32, i32, i32
  }
  func.func @transform_3(%arg0: i32, %arg1: i32) -> (i32, i32, i32) {
    %c0_i32 = arith.constant 0 : i32
    %c0_i32_0 = arith.constant 0 : i32
    %c0_i32_1 = arith.constant 0 : i32
    return %arg0, %c0_i32, %c0_i32_0 : i32, i32, i32
  }
  func.func @transform_4(%arg0: i32, %arg1: i32) -> (i32, i32, i32) {
    %c0_i32 = arith.constant 0 : i32
    %c0_i32_0 = arith.constant 0 : i32
    %c0_i32_1 = arith.constant 0 : i32
    return %arg0, %c0_i32, %c0_i32_0 : i32, i32, i32
  }
}

</mosaic_0001>

<llo_original>
// kernel: tpu_custom_call.1
$region0: #{tpu_custom_call.1}
  #allocation0 [shape = 'u32[]', space=smem, size = 0x4, offset = 0x4, fixed_abs, tag = 'smem constant byte address 0x4 - core index']
  #allocation1 [shape = 'u32[72,128]{1,0:T(1,128)}', space=vmem, size = 0x9000, scoped, tag = 'internal scratch']
  %s0 = inlined_call_operand.vmem [shape: f32[64,8], index: 0, kind: input, shape index: {}]
  %s1 = inlined_call_operand.vmem [shape: f32[64,16], index: 1, kind: input, shape index: {}]
  %s2 = inlined_call_operand.hbm [shape: f32[1,8,16], index: 2, kind: output, shape index: {0}]
  %s3 = inlined_call_operand.hbm [shape: f32[1,1,8], index: 3, kind: output, shape index: {1}]
  %s4 = inlined_call_operand.hbm [shape: f32[1,1,16], index: 4, kind: output, shape index: {2}]
  %5 = xla_tuple %s2, %s3, %s4
  %s6 = sld [smem:[#allocation0]]
  $region38: #{tpu_custom_call.1} parent=0
    _
  %s8 = ssub.s32 1, %s6
  %s9 = scalar_select 0, %s8, %s6
  $region1: #{tpu_custom_call.1} parent=0
    #allocation2 [shape = 'u8[4096]{0}', space=vmem, size = 0x1000, scoped, tag = 'output window, operand 0, single buffered']
    #allocation3 [shape = 's32[1]{0}', space=sflag, size = 0x4, scoped, tag = 'scoped memory for tpu_custom_call.1']
    #allocation4 [shape = 'u8[512]{0}', space=vmem, size = 0x400, scoped, tag = 'output window, operand 1, single buffered']
    #allocation5 [shape = 's32[1]{0}', space=sflag, size = 0x4, scoped, tag = 'scoped memory for tpu_custom_call.1']
    #allocation6 [shape = 'u8[512]{0}', space=vmem, size = 0x400, scoped, tag = 'output window, operand 2, single buffered']
    %10 = vsyncpa [#allocation3], 0
    %11 = vsyncpa [#allocation5], 0
    // Predicated region
    $region2: #{tpu_custom_call.1} parent=1 // pred_check
      _
    $region3: #{tpu_custom_call.1} parent=1 // pred_check_branch
      %13 = sbr.rel (0) target = $region5
    $region4: #{tpu_custom_call.1} parent=1 // pred_region
      %s14 = sadd.s32 0, 0
      %p15 = scmp.lt.s32.totalorder %s14, 0
      %s16 = scalar_select %p15, %s14, 0
      %s17 = smul.u32 8, %s16
      %p18 = scmp.lt.s32.totalorder %s17, 7
      %s19 = scalar_select %p18, %s17, 7
      %s20 = smul.addr %s19, 8
      %s21 = scalar_lea.vmem %s0, %s20
      %s22 = sadd.s32 0, 0
      %p23 = scmp.lt.s32.totalorder %s22, 0
      %s24 = scalar_select %p23, %s22, 0
      %s25 = smul.u32 8, %s24
    $region5: #{tpu_custom_call.1} parent=1 // pred_fallthru
      _
    // Predicated region
    $region6: #{tpu_custom_call.1} parent=1 // pred_check
      _
    $region7: #{tpu_custom_call.1} parent=1 // pred_check_branch
      %27 = sbr.rel (0) target = $region9
    $region8: #{tpu_custom_call.1} parent=1 // pred_region
      %s28 = sadd.s32 0, 0
      %p29 = scmp.lt.s32.totalorder %s28, 0
      %s30 = scalar_select %p29, %s28, 0
      %s31 = smul.u32 8, %s30
      %p32 = scmp.lt.s32.totalorder %s31, 7
      %s33 = scalar_select %p32, %s31, 7
      %s34 = smul.addr %s33, 8
      %s35 = scalar_lea.vmem %s1, %s34
      %s36 = sadd.s32 0, 0
      %p37 = scmp.lt.s32.totalorder %s36, 0
      %s38 = scalar_select %p37, %s36, 0
      %s39 = smul.u32 8, %s38
    $region9: #{tpu_custom_call.1} parent=1 // pred_fallthru
      _
    %s40 = sadd.s32 0, 0
    %p41 = scmp.lt.s32.totalorder %s40, 0
    %s42 = scalar_select %p41, %s40, 0
    %s43 = smul.u32 8, %s42
    %p44 = scmp.lt.s32.totalorder %s43, 7
    %s45 = scalar_select %p44, %s43, 7
    %s46 = smul.addr %s45, 8
    %s47 = scalar_lea.vmem %s0, %s46
    %s48 = sadd.s32 0, 0
    %p49 = scmp.lt.s32.totalorder %s48, 0
    %s50 = scalar_select %p49, %s48, 0
    %s51 = smul.u32 8, %s50
    %p52 = scmp.lt.s32.totalorder %s51, 7
    %s53 = scalar_select %p52, %s51, 7
    %s54 = smul.addr %s53, 8
    %s55 = scalar_lea.vmem %s1, %s54
    %s56 = sadd.s32 0, 0
    %p57 = scmp.lt.s32.totalorder %s56, 0
    %s58 = scalar_select %p57, %s56, 0
    %s59 = smul.u32 8, %s58
    %p60 = scmp.lt.s32.totalorder %s59, 7
    %s61 = scalar_select %p60, %s59, 7
    %s62 = smul.addr %s61, 8
    %s63 = scalar_lea.vmem %s0, %s62
    %s64 = sadd.s32 0, 0
    %p65 = scmp.lt.s32.totalorder %s64, 0
    %s66 = scalar_select %p65, %s64, 0
    %s67 = smul.u32 8, %s66
    %s68 = sadd.s32 0, 0
    %p69 = scmp.lt.s32.totalorder %s68, 0
    %s70 = scalar_select %p69, %s68, 0
    %s71 = smul.u32 8, %s70
    %p72 = scmp.lt.s32.totalorder %s71, 7
    %s73 = scalar_select %p72, %s71, 7
    %s74 = smul.addr %s73, 8
    %s75 = scalar_lea.vmem %s1, %s74
    %s76 = sadd.s32 0, 0
    %p77 = scmp.lt.s32.totalorder %s76, 0
    %s78 = scalar_select %p77, %s76, 0
    %s79 = smul.u32 8, %s78
    %p81 = scmp.eq.s32.totalorder 0, 0
    // Predicated region
    $region10: #{tpu_custom_call.1} parent=1 // pred_check
      %p82 = pneg %p81
    $region11: #{tpu_custom_call.1} parent=1 // pred_check_branch
      %84 = sbr.rel (%p82) target = $region13
    $region12: #{tpu_custom_call.1} parent=1 // pred_region
      %vm85 = vcmask 130048
      %86 = vst.msk [vmem:[#allocation2] sm:$0xff] %vm85, 0.0
      %vm87 = vcmask 57344
      %88 = vst.msk [vmem:[#allocation4] sm:$0x1] %vm87, 0.0
      %vm89 = vcmask 122880
      %90 = vst.msk [vmem:[#allocation6] sm:$0x1] %vm89, 0.0
    $region13: #{tpu_custom_call.1} parent=1 // pred_fallthru
      _
    %v91 = vld [vmem:[%s63] sm:$0xff]
    %v92 = vld [vmem:[%s63 + $0x8] sm:$0xff]
    %v93 = vld [vmem:[%s63 + $0x10] sm:$0xff]
    %v94 = vld [vmem:[%s63 + $0x18] sm:$0xff]
    %v95 = vld [vmem:[%s63 + $0x20] sm:$0xff]
    %v96 = vld [vmem:[%s63 + $0x28] sm:$0xff]
    %v97 = vld [vmem:[%s63 + $0x30] sm:$0xff]
    %v98 = vld [vmem:[%s63 + $0x38] sm:$0xff]
    %v99 = vld [vmem:[%s75] sm:$0xff]
    %v100 = vld [vmem:[%s75 + $0x8] sm:$0xff]
    %v101 = vld [vmem:[%s75 + $0x10] sm:$0xff]
    %v102 = vld [vmem:[%s75 + $0x18] sm:$0xff]
    %v103 = vld [vmem:[%s75 + $0x20] sm:$0xff]
    %v104 = vld [vmem:[%s75 + $0x28] sm:$0xff]
    %v105 = vld [vmem:[%s75 + $0x30] sm:$0xff]
    %v106 = vld [vmem:[%s75 + $0x38] sm:$0xff]
    %v107 = vpack.c.bf16 %v92, %v91
    %v108 = vpack.c.bf16 %v94, %v93
    %v109 = vpack.c.bf16 %v96, %v95
    %v110 = vpack.c.bf16 %v98, %v97
    %v111 = vpack.c.bf16 %v100, %v99
    %v112 = vpack.c.bf16 %v102, %v101
    %v113 = vpack.c.bf16 %v104, %v103
    %v114 = vpack.c.bf16 %v106, %v105
    %v115 = vld [vmem:[#allocation2] sm:$0xff]
    %116 = vxpose.xlu0.c.b16.start [1/8] %v107, 128
    %117 = vxpose.xlu0.c.b16.cont [2/8] %v108, 128
    %118 = vxpose.xlu0.c.b16.cont [3/8] %v109, 128
    %119 = vxpose.xlu0.c.b16.cont [4/8] %v110, 128
    %120 = vxpose.xlu0.c.b16.cont [5/8] 0, 128
    %121 = vxpose.xlu0.c.b16.cont [6/8] 0, 128
    %122 = vxpose.xlu0.c.b16.cont [7/8] 0, 128
    %123 = vxpose.xlu0.c.b16.end [8/8] 0, 128
    %v124 = vpop.trf.xlu0
    %v125 = vpop.trf.xlu0
    %v126 = vpop.trf.xlu0
    %v127 = vpop.trf.xlu0
    %v128 = vpop.trf.xlu0
    %v129 = vpop.trf.xlu0
    %v130 = vpop.trf.xlu0
    %v131 = vpop.trf.xlu0
    %vm132 = vcmask 523264
    %v134 = vsel %vm132, %v124, 0
    %136 = vmatpush.bf16.msra.mxu0 0
    %137 = vmatpush.bf16.msra.mxu0 0
    %138 = vmatpush.bf16.msra.mxu0 0
    %139 = vmatpush.bf16.msra.mxu0 0
    %140 = vmatpush.bf16.msra.mxu0 %v114
    %141 = vmatpush.bf16.msra.mxu0 %v113
    %142 = vmatpush.bf16.msra.mxu0 %v112
    %143 = vmatpush.bf16.msra.mxu0 %v111
    %144 = vmatmul.bf16.gmra.mxu0 %v134
    %v145 = vpop.f32.mrf.mxu0
    %v146 = vadd.f32 0.0, %v145
    %v147 = vpop.f32.mrf.mxu0
    %148 = vdwg.mxu0
    %v149 = vadd.f32 %v115, %v146
    %vm150 = vcmask 130048
    %151 = vst.msk [vmem:[#allocation2] sm:$0xff] %vm150, %v149
    %v152 = vld [vmem:[#allocation4] sm:$0x1]
    %vm153 = vcmask 64512
    %v154 = vsel %vm153, %v91, 0.0
    %v155 = vsel %vm153, %v92, 0.0
    %v156 = vadd.f32 %v154, %v155
    %v157 = vsel %vm153, %v93, 0.0
    %v158 = vadd.f32 %v156, %v157
    %v159 = vsel %vm153, %v94, 0.0
    %v160 = vadd.f32 %v158, %v159
    %v161 = vsel %vm153, %v95, 0.0
    %v162 = vadd.f32 %v160, %v161
    %v163 = vsel %vm153, %v96, 0.0
    %v164 = vadd.f32 %v162, %v163
    %v165 = vsel %vm153, %v97, 0.0
    %v166 = vadd.f32 %v164, %v165
    %v167 = vsel %vm153, %v98, 0.0
    %v168 = vadd.f32 %v166, %v167
    %v169 = vrot.slane %v168, 4
    %v170 = vadd.f32 %v168, %v169
    %v171 = vrot.slane %v170, 2
    %v172 = vadd.f32 %v170, %v171
    %v173 = vrot.slane %v172, 1
    %v174 = vadd.f32 %v172, %v173
    %v175 = vadd.f32 %v152, %v174
    %vm176 = vcmask 57344
    %177 = vst.msk [vmem:[#allocation4] sm:$0x1] %vm176, %v175
    %v178 = vld [vmem:[#allocation6] sm:$0x1]
    %v179 = vsel %vm150, %v99, 0.0
    %v180 = vsel %vm150, %v100, 0.0
    %v181 = vadd.f32 %v179, %v180
    %v182 = vsel %vm150, %v101, 0.0
    %v183 = vadd.f32 %v181, %v182
    %v184 = vsel %vm150, %v102, 0.0
    %v185 = vadd.f32 %v183, %v184
    %v186 = vsel %vm150, %v103, 0.0
    %v187 = vadd.f32 %v185, %v186
    %v188 = vsel %vm150, %v104, 0.0
    %v189 = vadd.f32 %v187, %v188
    %v190 = vsel %vm150, %v105, 0.0
    %v191 = vadd.f32 %v189, %v190
    %v192 = vsel %vm150, %v106, 0.0
    %v193 = vadd.f32 %v191, %v192
    %v194 = vrot.slane %v193, 4
    %v195 = vadd.f32 %v193, %v194
    %v196 = vrot.slane %v195, 2
    %v197 = vadd.f32 %v195, %v196
    %v198 = vrot.slane %v197, 1
    %v199 = vadd.f32 %v197, %v198
    %v200 = vadd.f32 %v178, %v199
    %vm201 = vcmask 122880
    %202 = vst.msk [vmem:[#allocation6] sm:$0x1] %vm201, %v200
    // Predicated region
    $region14: #{tpu_custom_call.1} parent=1 // pred_check
      _
    $region15: #{tpu_custom_call.1} parent=1 // pred_check_branch
      %204 = sbr.rel (0) target = $region17
    $region16: #{tpu_custom_call.1} parent=1 // pred_region
      %206 = vsyncadd [#allocation3], 0
      %s208 = sshll.u32 [#allocation2], 4
      %s209 = int_to_ptr.vmem [resolvable:$true] %s208
      %s210 = sshll.u32 %s2, 4
      %s211 = int_to_ptr.hbm [resolvable:$true] %s210
      %213 = dma.vmem_to_hbm [thread:$0]  %s209, 128, %s211, [#allocation3]
    $region17: #{tpu_custom_call.1} parent=1 // pred_fallthru
      _
    // Predicated region
    $region18: #{tpu_custom_call.1} parent=1 // pred_check
      _
    $region19: #{tpu_custom_call.1} parent=1 // pred_check_branch
      %215 = sbr.rel (0) target = $region21
    $region20: #{tpu_custom_call.1} parent=1 // pred_region
      %217 = vsyncadd [#allocation5], 0
      %s219 = sshll.u32 [#allocation4], 4
      %s220 = int_to_ptr.vmem [resolvable:$true] %s219
      %s221 = sshll.u32 %s3, 4
      %s222 = int_to_ptr.hbm [resolvable:$true] %s221
      %224 = dma.vmem_to_hbm [thread:$0]  %s220, 16, %s222, [#allocation5]
    $region21: #{tpu_custom_call.1} parent=1 // pred_fallthru
      _
    // Predicated region
    $region22: #{tpu_custom_call.1} parent=1 // pred_check
      _
    $region23: #{tpu_custom_call.1} parent=1 // pred_check_branch
      %226 = sbr.rel (0) target = $region25
    $region24: #{tpu_custom_call.1} parent=1 // pred_region
      %228 = vsyncadd [#allocation5], 0
      %s230 = sshll.u32 [#allocation6], 4
      %s231 = int_to_ptr.vmem [resolvable:$true] %s230
      %s232 = sshll.u32 %s4, 4
      %s233 = int_to_ptr.hbm [resolvable:$true] %s232
      %235 = dma.vmem_to_hbm [thread:$0]  %s231, 16, %s233, [#allocation5]
    $region25: #{tpu_custom_call.1} parent=1 // pred_fallthru
      _
    // Predicated region
    $region26: #{tpu_custom_call.1} parent=1 // pred_check
      _
    $region27: #{tpu_custom_call.1} parent=1 // pred_check_branch
      %237 = sbr.rel (0) target = $region29
    $region28: #{tpu_custom_call.1} parent=1 // pred_region
      %239 = dma.done [#allocation3], 128
    $region29: #{tpu_custom_call.1} parent=1 // pred_fallthru
      _
    // Predicated region
    $region30: #{tpu_custom_call.1} parent=1 // pred_check
      _
    $region31: #{tpu_custom_call.1} parent=1 // pred_check_branch
      %241 = sbr.rel (0) target = $region33
    $region32: #{tpu_custom_call.1} parent=1 // pred_region
      %243 = dma.done [#allocation5], 16
    $region33: #{tpu_custom_call.1} parent=1 // pred_fallthru
      _
    // Predicated region
    $region34: #{tpu_custom_call.1} parent=1 // pred_check
      _
    $region35: #{tpu_custom_call.1} parent=1 // pred_check_branch
      %245 = sbr.rel (0) target = $region37
    $region36: #{tpu_custom_call.1} parent=1 // pred_region
      %247 = dma.done [#allocation5], 16
    $region37: #{tpu_custom_call.1} parent=1 // pred_fallthru
      _
    %248 = vsyncpa [#allocation3], 1
    %249 = vsyncpa [#allocation5], 1

</llo_original>
